<compile_context>
chip_gen: v6e
topology: v6e:2x2x1
jax: 0.10.0
libtpu: 0.0.40
codegen_flags: <defaults>
</compile_context>

<pallas_src>
import functools

import jax
import jax.numpy as jnp
import numpy as np
from jax.experimental import pallas as pl
from jax.experimental.pallas import tpu as pltpu


def _weighted_kernel(pred_ref, gt_ref, w_ref, out_ref, *, block_rows, n_rows):
    """One grid step = one (block_rows, HW) row tile of the flattened heatmaps."""
    i = pl.program_id(0)
    d = pred_ref[...].astype(jnp.float32) - gt_ref[...].astype(jnp.float32)
    row_ss = jnp.sum(d * d, axis=1, keepdims=True)            # (TR, 1)
    w = w_ref[...].astype(jnp.float32)                         # (TR, 1)
    contrib = row_ss * (w * w)
    # Mask rows past the end of the (B*J) row dimension (partial last tile).
    rows = jax.lax.broadcasted_iota(jnp.int32, (block_rows, 1), 0) + i * block_rows
    contrib = jnp.where(rows < n_rows, contrib, 0.0)
    out_ref[...] = jnp.broadcast_to(jnp.sum(contrib), out_ref.shape)


def _unweighted_kernel(pred_ref, gt_ref, out_ref, *, block_rows, n_rows):
    i = pl.program_id(0)
    d = pred_ref[...].astype(jnp.float32) - gt_ref[...].astype(jnp.float32)
    row_ss = jnp.sum(d * d, axis=1, keepdims=True)             # (TR, 1)
    rows = jax.lax.broadcasted_iota(jnp.int32, (block_rows, 1), 0) + i * block_rows
    contrib = jnp.where(rows < n_rows, row_ss, 0.0)
    out_ref[...] = jnp.broadcast_to(jnp.sum(contrib), out_ref.shape)


# Per-input tile budget: 2 inputs x 2 pipeline buffers x 2 MiB ~= 8 MiB VMEM,
# safe under the default scoped VMEM limit on v5e (16 MiB) / v6e / v7x (32 MiB).
_TARGET_TILE_BYTES = 2 * 1024 * 1024


def joints_mse_loss(output, target, target_weight=None, use_target_weight=True):
    """Pallas implementation of JointsMSELoss.forward.

    output, target : (B, J, H, W)
    target_weight  : (B, J, 1)   (only read when use_target_weight=True)
    returns        : scalar f32 loss
    """
    B, J, H, W = output.shape
    HW = H * W
    N = B * J

    # Zero-copy, row-major flatten — no HBM round-trip transpose.
    pred = output.reshape(N, HW)
    gt = target.reshape(N, HW)

    itemsize = jnp.dtype(output.dtype).itemsize
    tr = (_TARGET_TILE_BYTES // max(HW * itemsize, 1)) // 8 * 8
    tr = max(8, min(tr, 2048))
    if N <= tr:
        tr = N  # one block covering all rows (block == full dim is always legal)
    num_tiles = pl.cdiv(N, tr)

    flops = 3 * N * HW
    bytes_accessed = 2 * N * HW * itemsize + num_tiles * 8 * 128 * 4

    in_arrays = [pred, gt]
    in_specs = [
        pl.BlockSpec((tr, HW), lambda i: (i, 0)),
        pl.BlockSpec((tr, HW), lambda i: (i, 0)),
    ]
    if use_target_weight:
        w = target_weight.reshape(N, 1)
        in_arrays.append(w)
        in_specs.append(pl.BlockSpec((tr, 1), lambda i: (i, 0)))
        bytes_accessed += N * jnp.dtype(w.dtype).itemsize
        kernel = functools.partial(_weighted_kernel, block_rows=tr, n_rows=N)
    else:
        kernel = functools.partial(_unweighted_kernel, block_rows=tr, n_rows=N)

    partials = pl.pallas_call(
        kernel,
        out_shape=jax.ShapeDtypeStruct((num_tiles, 8, 128), jnp.float32),
        grid_spec=pltpu.PrefetchScalarGridSpec(
            num_scalar_prefetch=0,
            grid=(num_tiles,),
            in_specs=in_specs,
            out_specs=pl.BlockSpec((None, 8, 128), lambda i: (i, 0, 0)),
        ),
        compiler_params=pltpu.CompilerParams(
            dimension_semantics=("parallel",),
        ),
        cost_estimate=pl.CostEstimate(
            flops=flops, transcendentals=0, bytes_accessed=bytes_accessed
        ),
    )(*in_arrays)

    # Tiny final reduction + scaling in plain JAX.
    scale = 0.5 / (float(J) * float(B) * float(HW))
    return jnp.sum(partials[:, 0, 0]) * scale


def _reference_loss(output, target, target_weight, use_target_weight=True):
    """Plain-JAX reference mirroring the PyTorch loop."""
    B, J, H, W = output.shape
    pred = output.reshape(B, J, -1).astype(jnp.float32)
    gt = target.reshape(B, J, -1).astype(jnp.float32)
    loss = 0.0
    for idx in range(J):
        p = pred[:, idx, :]
        g = gt[:, idx, :]
        if use_target_weight:
            w = target_weight[:, idx].astype(jnp.float32)  # (B, 1)
            p = p * w
            g = g * w
        loss = loss + 0.5 * jnp.mean((p - g) ** 2)
    return loss / J


if __name__ == "__main__":
    key = jax.random.PRNGKey(0)
    k1, k2, k3 = jax.random.split(key, 3)

    B, J, H, W = 2, 4, 16, 16
    output = jax.random.normal(k1, (B, J, H, W), dtype=jnp.float32)
    target = jax.random.normal(k2, (B, J, H, W), dtype=jnp.float32)
    target_weight = jax.random.uniform(k3, (B, J, 1), dtype=jnp.float32)

    # Weighted path.
    loss_w = joints_mse_loss(output, target, target_weight, use_target_weight=True)
    loss_w = jax.block_until_ready(loss_w)
    ref_w = _reference_loss(output, target, target_weight, use_target_weight=True)
    assert np.allclose(np.asarray(loss_w), np.asarray(ref_w), rtol=1e-5, atol=1e-6)

    # Unweighted path (no weight tensor is streamed).
    loss_u = joints_mse_loss(output, target, None, use_target_weight=False)
    loss_u = jax.block_until_ready(loss_u)
    ref_u = _reference_loss(output, target, target_weight, use_target_weight=False)
    assert np.allclose(np.asarray(loss_u), np.asarray(ref_u), rtol=1e-5, atol=1e-6)

    print("KERNEL_OK")
</pallas_src>

<mosaic_0001>
module attributes {stable_mosaic.version = 11 : i64} {
  func.func @_weighted_kernel(%arg0: i32, %arg1: memref<8x256xf32, #tpu.memory_space<vmem>>, %arg2: memref<8x256xf32, #tpu.memory_space<vmem>>, %arg3: memref<8x1xf32, #tpu.memory_space<vmem>>, %arg4: memref<1x8x128xf32, #tpu.memory_space<vmem>>) attributes {dimension_semantics = [#tpu.dimension_semantics<parallel>], iteration_bounds = array<i64: 1>, scalar_prefetch = 0 : i64, scratch_operands = 0 : i64, tpu.core_type = #tpu.core_type<tc>, window_params = [{transform_indices = @transform_0, window_bounds = array<i64: 8, 256>}, {transform_indices = @transform_1, window_bounds = array<i64: 8, 256>}, {transform_indices = @transform_2, window_bounds = array<i64: 8, 1>}, {transform_indices = @transform_3, window_bounds = array<i64: 1, 8, 128>}]} {
    %c0 = arith.constant 0 : index
    %c0_0 = arith.constant 0 : index
    %0 = vector.load %arg1[%c0, %c0_0] : memref<8x256xf32, #tpu.memory_space<vmem>>, vector<8x256xf32>
    %c0_1 = arith.constant 0 : index
    %c0_2 = arith.constant 0 : index
    %1 = vector.load %arg2[%c0_1, %c0_2] : memref<8x256xf32, #tpu.memory_space<vmem>>, vector<8x256xf32>
    %2 = arith.subf %0, %1 : vector<8x256xf32>
    %3 = arith.mulf %2, %2 : vector<8x256xf32>
    %cst = arith.constant dense<0.000000e+00> : vector<8xf32>
    %4 = vector.multi_reduction <add>, %3, %cst [1] : vector<8x256xf32> to vector<8xf32>
    %5 = vector.shape_cast %4 : vector<8xf32> to vector<8x1xf32>
    %c0_3 = arith.constant 0 : index
    %c0_4 = arith.constant 0 : index
    %6 = vector.load %arg3[%c0_3, %c0_4] : memref<8x1xf32, #tpu.memory_space<vmem>>, vector<8x1xf32>
    %7 = arith.mulf %6, %6 : vector<8x1xf32>
    %8 = arith.mulf %5, %7 : vector<8x1xf32>
    %9 = tpu.iota {dimensions = array<i32: 0>} : vector<8x1xi32>
    %c8_i32 = arith.constant 8 : i32
    %10 = arith.muli %arg0, %c8_i32 : i32
    %11 = vector.broadcast %10 : i32 to vector<8x1xi32>
    %12 = arith.addi %9, %11 : vector<8x1xi32>
    %c8_i32_5 = arith.constant 8 : i32
    %13 = vector.broadcast %c8_i32_5 : i32 to vector<8x1xi32>
    %14 = arith.cmpi slt, %12, %13 : vector<8x1xi32>
    %cst_6 = arith.constant 0.000000e+00 : f32
    %15 = vector.broadcast %cst_6 : f32 to vector<8x1xf32>
    %16 = arith.select %14, %8, %15 : vector<8x1xi1>, vector<8x1xf32>
    %17 = vector.shape_cast %16 : vector<8x1xf32> to vector<1x8x1xf32>
    %cst_7 = arith.constant dense<0.000000e+00> : vector<1xf32>
    %18 = vector.multi_reduction <add>, %17, %cst_7 [1, 2] : vector<1x8x1xf32> to vector<1xf32>
    %19 = vector.shape_cast %18 : vector<1xf32> to vector<1x1x1xf32>
    %20 = vector.extract %19[0, 0, 0] : f32 from vector<1x1x1xf32>
    %21 = vector.broadcast %20 : f32 to vector<8x128xf32>
    %c0_8 = arith.constant 0 : index
    %c0_9 = arith.constant 0 : index
    %c0_10 = arith.constant 0 : index
    %22 = vector.load %arg4[%c0_8, %c0_9, %c0_10] : memref<1x8x128xf32, #tpu.memory_space<vmem>>, vector<1x8x128xf32>
    %23 = vector.shape_cast %22 : vector<1x8x128xf32> to vector<8x128xf32>
    %24 = vector.shape_cast %21 : vector<8x128xf32> to vector<1x8x128xf32>
    tpu.vector_store %arg4[%c0_8, %c0_9, %c0_10], %24 {strides = array<i32>} : memref<1x8x128xf32, #tpu.memory_space<vmem>>, vector<1x8x128xf32>,
    return
  }
  func.func @transform_0(%arg0: i32) -> (i32, i32) {
    %c0_i32 = arith.constant 0 : i32
    %c0_i32_0 = arith.constant 0 : i32
    return %arg0, %c0_i32 : i32, i32
  }
  func.func @transform_1(%arg0: i32) -> (i32, i32) {
    %c0_i32 = arith.constant 0 : i32
    %c0_i32_0 = arith.constant 0 : i32
    return %arg0, %c0_i32 : i32, i32
  }
  func.func @transform_2(%arg0: i32) -> (i32, i32) {
    %c0_i32 = arith.constant 0 : i32
    %c0_i32_0 = arith.constant 0 : i32
    return %arg0, %c0_i32 : i32, i32
  }
  func.func @transform_3(%arg0: i32) -> (i32, i32, i32) {
    %c0_i32 = arith.constant 0 : i32
    %c0_i32_0 = arith.constant 0 : i32
    %c0_i32_1 = arith.constant 0 : i32
    return %arg0, %c0_i32, %c0_i32_0 : i32, i32, i32
  }
}

</mosaic_0001>

<llo_original>
// kernel: tpu_custom_call.1
$region0: #{tpu_custom_call.1}
  #allocation0 [shape = 'u32[]', space=smem, size = 0x4, offset = 0x4, fixed_abs, tag = 'smem constant byte address 0x4 - core index']
  #allocation1 [shape = 'u32[144,128]{1,0:T(1,128)}', space=vmem, size = 0x12000, scoped, tag = 'internal scratch']
  %s0 = inlined_call_operand.hbm [shape: f32[8,256], index: 0, kind: input, shape index: {}]
  %s1 = inlined_call_operand.hbm [shape: f32[8,256], index: 1, kind: input, shape index: {}]
  %s2 = inlined_call_operand.vmem [shape: f32[8,1], index: 2, kind: input, shape index: {}]
  %s3 = inlined_call_operand.hbm [shape: f32[1,8,128], index: 3, kind: output, shape index: {}]
  %s4 = sld [smem:[#allocation0]]
  $region30: #{tpu_custom_call.1} parent=0
    _
  %s6 = ssub.s32 1, %s4
  %s7 = scalar_select 0, %s6, %s4
  $region1: #{tpu_custom_call.1} parent=0
    #allocation2 [shape = 'u8[8192]{0}', space=vmem, size = 0x2000, scoped, tag = 'input window, operand 0, single buffered']
    #allocation3 [shape = 's32[1]{0}', space=sflag, size = 0x4, scoped, tag = 'scoped memory for tpu_custom_call.1']
    #allocation4 [shape = 's32[1]{0}', space=sflag, size = 0x4, scoped, tag = 'scoped memory for tpu_custom_call.1']
    #allocation5 [shape = 'u8[8192]{0}', space=vmem, size = 0x2000, scoped, tag = 'input window, operand 1, single buffered']
    #allocation6 [shape = 's32[1]{0}', space=sflag, size = 0x4, scoped, tag = 'scoped memory for tpu_custom_call.1']
    #allocation7 [shape = 'u8[4096]{0}', space=vmem, size = 0x1000, scoped, tag = 'output window, operand 0, single buffered']
    %8 = vsyncpa [#allocation3], 0
    %9 = vsyncpa [#allocation6], 0
    %10 = vsyncpa [#allocation4], 0
    // Predicated region
    $region2: #{tpu_custom_call.1} parent=1 // pred_check
      _
    $region3: #{tpu_custom_call.1} parent=1 // pred_check_branch
      %12 = sbr.rel (0) target = $region5
    $region4: #{tpu_custom_call.1} parent=1 // pred_region
      %s14 = ssub.s32 256, 256
      %15 = vsyncadd [#allocation3], %s14
      %s17 = sshll.u32 [#allocation2], 4
      %s18 = int_to_ptr.vmem [resolvable:$true] %s17
      %20 = dma.hbm_to_vmem [thread:$0]  %s0, 256, %s18, [#allocation3]
    $region5: #{tpu_custom_call.1} parent=1 // pred_fallthru
      _
    // Predicated region
    $region6: #{tpu_custom_call.1} parent=1 // pred_check
      _
    $region7: #{tpu_custom_call.1} parent=1 // pred_check_branch
      %22 = sbr.rel (0) target = $region9
    $region8: #{tpu_custom_call.1} parent=1 // pred_region
      %s24 = ssub.s32 256, 256
      %25 = vsyncadd [#allocation6], %s24
      %s27 = sshll.u32 [#allocation5], 4
      %s28 = int_to_ptr.vmem [resolvable:$true] %s27
      %30 = dma.hbm_to_vmem [thread:$0]  %s1, 256, %s28, [#allocation6]
    $region9: #{tpu_custom_call.1} parent=1 // pred_fallthru
      _
    // Predicated region
    $region10: #{tpu_custom_call.1} parent=1 // pred_check
      _
    $region11: #{tpu_custom_call.1} parent=1 // pred_check_branch
      %32 = sbr.rel (0) target = $region13
    $region12: #{tpu_custom_call.1} parent=1 // pred_region
      _
    $region13: #{tpu_custom_call.1} parent=1 // pred_fallthru
      _
    // Predicated region
    $region14: #{tpu_custom_call.1} parent=1 // pred_check
      _
    $region15: #{tpu_custom_call.1} parent=1 // pred_check_branch
      %34 = sbr.rel (0) target = $region17
    $region16: #{tpu_custom_call.1} parent=1 // pred_region
      %35 = dma.done [#allocation3], 256
    $region17: #{tpu_custom_call.1} parent=1 // pred_fallthru
      _
    // Predicated region
    $region18: #{tpu_custom_call.1} parent=1 // pred_check
      _
    $region19: #{tpu_custom_call.1} parent=1 // pred_check_branch
      %37 = sbr.rel (0) target = $region21
    $region20: #{tpu_custom_call.1} parent=1 // pred_region
      %38 = dma.done [#allocation6], 256
    $region21: #{tpu_custom_call.1} parent=1 // pred_fallthru
      _
    %v39 = vld [vmem:[#allocation2] sm:$0xff]
    %v40 = vld [vmem:[#allocation2 + $0x8] sm:$0xff]
    %v41 = vld [vmem:[#allocation5] sm:$0xff]
    %v42 = vld [vmem:[#allocation5 + $0x8] sm:$0xff]
    %v43 = vsub.f32 %v39, %v41
    %v44 = vsub.f32 %v40, %v42
    %v45 = vmul.f32 %v43, %v43
    %v46 = vmul.f32 %v44, %v44
    %v47 = vadd.f32 %v45, %v46
    %48 = vadd.xlane.f32.xlu0 %v47
    %v49 = vpop.xlane.xlu0 %48
    %v50 = vld [vmem:[%s2] sm:$0xff]
    %v51 = vmul.f32 %v50, %v50
    %v52 = vmul.f32 %v49, %v51
    %v53 = vlaneseq
    %v54 = vshrl.u32 %v53, 7
    %s55 = smul.u32 0, 8
    %v56 = vstv %s55
    %v57 = vadd.s32 %v54, %v56
    %vm58 = vcmp.lt.s32.totalorder %v57, 8
    %v59 = vsel %vm58, %v52, 0.0
    %vm60 = vcmask 7168
    %v61 = vsel %vm60, %v59, 0.0
    %62 = vadd.xlane.f32.xlu0 %v61
    %v63 = vpop.xlane.xlu0 %62
    %v64 = vrot.slane %v63, 4
    %v65 = vadd.f32 %v63, %v64
    %v66 = vrot.slane %v65, 2
    %v67 = vadd.f32 %v65, %v66
    %v68 = vrot.slane %v67, 1
    %v69 = vadd.f32 %v67, %v68
    %s70 = vtos %v69
    %v71 = vstv %s70
    %72 = vst [vmem:[#allocation7] sm:$0xff] %v71
    // Predicated region
    $region22: #{tpu_custom_call.1} parent=1 // pred_check
      _
    $region23: #{tpu_custom_call.1} parent=1 // pred_check_branch
      %74 = sbr.rel (0) target = $region25
    $region24: #{tpu_custom_call.1} parent=1 // pred_region
      %s76 = ssub.s32 128, 128
      %77 = vsyncadd [#allocation4], %s76
      %s79 = sshll.u32 [#allocation7], 4
      %s80 = int_to_ptr.vmem [resolvable:$true] %s79
      %82 = dma.vmem_to_hbm [thread:$0]  %s80, 128, %s3, [#allocation4]
    $region25: #{tpu_custom_call.1} parent=1 // pred_fallthru
      _
    // Predicated region
    $region26: #{tpu_custom_call.1} parent=1 // pred_check
      _
    $region27: #{tpu_custom_call.1} parent=1 // pred_check_branch
      %84 = sbr.rel (0) target = $region29
    $region28: #{tpu_custom_call.1} parent=1 // pred_region
      %85 = dma.done [#allocation4], 128
    $region29: #{tpu_custom_call.1} parent=1 // pred_fallthru
      _
    %86 = vsyncpa [#allocation3], 1
    %87 = vsyncpa [#allocation6], 1
    %88 = vsyncpa [#allocation4], 1

</llo_original>
